<compile_context>
chip_gen: v5e
topology: v5e:2x2
jax: 0.10.0
libtpu: 0.0.40
codegen_flags: <defaults>
</compile_context>

<pallas_src>
import jax
import jax.numpy as jnp
from jax.experimental import pallas as pl
from jax.experimental.pallas import tpu as pltpu

BN_EPS = 1e-5


def _stats_kernel(x_ref, colsum_ref, gram_ref):
    """Accumulate x-side sufficient statistics for one (batch, tile) grid step.

    x_ref:      (1, Cin, T)    lane-dense pixel tile
    colsum_ref: (1, Cin, 1)    per-batch partial  sum_p x[:, p]
    gram_ref:   (1, Cin, Cin)  per-batch partial  sum_p x[:, p] x[:, p]^T
    """
    @pl.when(pl.program_id(1) == 0)
    def _init():
        colsum_ref[...] = jnp.zeros_like(colsum_ref)
        gram_ref[...] = jnp.zeros_like(gram_ref)

    x = x_ref[0].astype(jnp.float32)                       # (Cin, T)
    colsum_ref[0] += jnp.sum(x, axis=1, keepdims=True)     # XLU lane reduce
    # G += x @ x^T: contract the lane axis on the MXU (VALU slot stays free).
    gram_ref[0] += jax.lax.dot_general(
        x, x, (((1,), (1,)), ((), ())), preferred_element_type=jnp.float32)


def _apply_kernel(x_ref, w1s_ref, shift_ref, w2_ref, b2_ref, o_ref):
    """h = (scale*W1) @ x + shift ; ReLU ; out = W2 @ h + b2   (both matmuls on MXU)."""
    h = jnp.dot(w1s_ref[...], x_ref[0], preferred_element_type=jnp.float32)
    h = jnp.maximum(h + shift_ref[...], 0.0)               # only +shift / ReLU on the VPU
    out = jnp.dot(w2_ref[...], h, preferred_element_type=jnp.float32) + b2_ref[...]
    o_ref[0] = out.astype(o_ref.dtype)                     # lane-dense (Cout, T) store


def _choose_tile_and_pad(hw, max_lane_tile=2048):
    """Pick lane tile T (multiple of 128, <= max_lane_tile) and the zero-padded pixel count."""
    assert max_lane_tile % 128 == 0
    hw128 = (hw + 127) // 128 * 128                          # 128-lane alignment
    num_tiles = (hw128 + max_lane_tile - 1) // max_lane_tile  # smallest tile count under cap
    t = ((hw128 + num_tiles - 1) // num_tiles + 127) // 128 * 128  # near-even split
    return t, num_tiles * t


def _vmem_limit_bytes():
    """Generation-aware but modest VMEM reservation (tiles are capped small)."""
    try:
        cap = pltpu.get_tpu_info().vmem_capacity_bytes   # 128 MiB v5e/v6e, 64 MiB/TC v7x
    except Exception:
        cap = 64 * 1024 * 1024
    return min(cap // 2, 32 * 1024 * 1024)


def mlp2d_forward(x_nchw, params, *, max_lane_tile=2048):
    """Forward pass of MLP2d. x_nchw: (N, Cin, H, W) -> (N, Cout, H, W)."""
    w1, b1, gamma, beta, w2, b2 = params
    del b1  # exactly cancelled by training-mode BN mean subtraction (see header comment)
    N, Cin, H, W = x_nchw.shape
    Cinner = w1.shape[0]
    Cout = w2.shape[0]
    HW = H * W
    P = N * HW  # real pixel count; zero-padded lanes never enter the statistics

    T, HWp = _choose_tile_and_pad(HW, max_lane_tile)
    num_tiles = HWp // T
    x3d = x_nchw.reshape(N, Cin, HW)  # contiguous reshape: no HBM data movement
    if HWp != HW:
        x3d = jnp.pad(x3d, ((0, 0), (0, 0), (0, HWp - HW)))  # zero lanes -> zero stats

    vmem_limit = _vmem_limit_bytes()

    # ---- phase 1: per-batch partial colsum / Gram of x (no Cinner-row work) -------
    # TODO(synk): when N == 1, split the tile axis 2-way into per-slice partials so
    # v7x megacore can still shard the stats pass.
    colsum_p, gram_p = pl.pallas_call(
        _stats_kernel,
        grid=(N, num_tiles),
        in_specs=[pl.BlockSpec((1, Cin, T), lambda n, t: (n, 0, t))],
        out_specs=[
            pl.BlockSpec((1, Cin, 1), lambda n, t: (n, 0, 0)),
            pl.BlockSpec((1, Cin, Cin), lambda n, t: (n, 0, 0)),
        ],
        out_shape=[
            jax.ShapeDtypeStruct((N, Cin, 1), jnp.float32),
            jax.ShapeDtypeStruct((N, Cin, Cin), jnp.float32),
        ],
        compiler_params=pltpu.CompilerParams(
            # batch axis: per-batch accumulators -> race-free -> megacore-shardable;
            # tile axis: reduction into a pinned block -> "arbitrary".
            dimension_semantics=("parallel", "arbitrary"),
            vmem_limit_bytes=vmem_limit,
        ),
    )(x3d)
    colsum = jnp.sum(colsum_p, axis=0)   # (Cin, 1)   reduce partials in plain JAX
    gram = jnp.sum(gram_p, axis=0)       # (Cin, Cin)

    # ---- fold BN into the weights (tiny plain-JAX math) ---------------------------
    # sum_h[i]   = sum_p (W1 x_p)_i   = (W1 @ colsum)_i
    # sumsq_h[i] = sum_p (W1 x_p)_i^2 = (W1 G W1^T)_{ii}
    sum_h = w1 @ colsum                                          # (Cinner, 1)
    sumsq_h = jnp.sum((w1 @ gram) * w1, axis=1, keepdims=True)   # (Cinner, 1)
    inv_count = 1.0 / float(P)
    mean = sum_h * inv_count
    # TODO(synk): single-pass E[h^2]-E[h]^2 in f32 can lose precision for very large P
    # or |mean| >> std; switch to a two-pass / per-tile-centred variant if that regime
    # ever matters.
    var = jnp.maximum(sumsq_h * inv_count - mean * mean, 0.0)    # biased, training-mode BN
    scale = gamma * jax.lax.rsqrt(var + BN_EPS)
    shift = beta - mean * scale
    w1_scaled = scale * w1                                       # fold BN scale into conv1

    # ---- phase 2: h = w1_scaled @ x + shift ; ReLU ; out = W2 @ h + b2 ------------
    out3d = pl.pallas_call(
        _apply_kernel,
        grid=(N, num_tiles),
        in_specs=[
            pl.BlockSpec((1, Cin, T), lambda n, t: (n, 0, t)),
            pl.BlockSpec((Cinner, Cin), lambda n, t: (0, 0)),
            pl.BlockSpec((Cinner, 1), lambda n, t: (0, 0)),
            pl.BlockSpec((Cout, Cinner), lambda n, t: (0, 0)),
            pl.BlockSpec((Cout, 1), lambda n, t: (0, 0)),
        ],
        out_specs=pl.BlockSpec((1, Cout, T), lambda n, t: (n, 0, t)),
        out_shape=jax.ShapeDtypeStruct((N, Cout, HWp), x_nchw.dtype),
        compiler_params=pltpu.CompilerParams(
            dimension_semantics=("parallel", "parallel"),  # independent tiles -> megacore
            vmem_limit_bytes=vmem_limit,
        ),
    )(x3d, w1_scaled, shift, w2, b2)

    if HWp != HW:
        out3d = out3d[:, :, :HW]   # drop the zero-padded lanes
    return out3d.reshape(N, Cout, H, W)  # contiguous reshape: no HBM data movement


def init_params(key, in_dim, inner_dim, out_dim):
    """Synthetic params matching the PyTorch module shapes (conv1x1 weights as (out, in))."""
    k1, k2, k3, k4, k5, k6 = jax.random.split(key, 6)
    w1 = jax.random.normal(k1, (inner_dim, in_dim), jnp.float32) * (1.0 / jnp.sqrt(in_dim))
    b1 = jax.random.normal(k2, (inner_dim, 1), jnp.float32) * 0.01
    gamma = 1.0 + 0.1 * jax.random.normal(k3, (inner_dim, 1), jnp.float32)
    beta = 0.1 * jax.random.normal(k4, (inner_dim, 1), jnp.float32)
    w2 = jax.random.normal(k5, (out_dim, inner_dim), jnp.float32) * (1.0 / jnp.sqrt(inner_dim))
    b2 = jax.random.normal(k6, (out_dim, 1), jnp.float32) * 0.01
    return (w1, b1, gamma, beta, w2, b2)


def _mlp2d_reference(x_nchw, params):
    """Pure-JAX reference of the PyTorch forward (includes b1, to prove it cancels)."""
    w1, b1, gamma, beta, w2, b2 = params
    N, Cin, H, W = x_nchw.shape
    x = x_nchw.reshape(N, Cin, H * W)
    h = jnp.einsum("oc,ncp->nop", w1, x) + b1[None]
    mean = jnp.mean(h, axis=(0, 2), keepdims=True)
    var = jnp.mean((h - mean) ** 2, axis=(0, 2), keepdims=True)  # biased, training-mode BN
    h = (h - mean) * jax.lax.rsqrt(var + BN_EPS) * gamma[None] + beta[None]
    h = jnp.maximum(h, 0.0)
    out = jnp.einsum("oc,ncp->nop", w2, h) + b2[None]
    return out.reshape(N, w2.shape[0], H, W)


if __name__ == "__main__":
    # Small shapes consistent with MLP2d(in_dim=4, inner_dim=32, out_dim=8)
    N, Cin, H, W = 2, 4, 16, 16
    Cinner, Cout = 32, 8

    key = jax.random.PRNGKey(0)
    kx, kp = jax.random.split(key)
    x = jax.random.normal(kx, (N, Cin, H, W), jnp.float32)
    params = init_params(kp, Cin, Cinner, Cout)

    out = jax.jit(mlp2d_forward)(x, params)
    jax.block_until_ready(out)
    assert out.shape == (N, Cout, H, W)

    ref = _mlp2d_reference(x, params)
    max_err = float(jnp.max(jnp.abs(out - ref)))
    assert max_err < 2e-3, f"mismatch vs reference: max abs err = {max_err}"
    print("KERNEL_OK")
</pallas_src>

<mosaic_0001>
module attributes {stable_mosaic.version = 11 : i64} {
  func.func @_stats_kernel(%arg0: i32, %arg1: i32, %arg2: memref<1x4x256xf32, #tpu.memory_space<vmem>>, %arg3: memref<1x4x1xf32, #tpu.memory_space<vmem>>, %arg4: memref<1x4x4xf32, #tpu.memory_space<vmem>>) attributes {dimension_semantics = [#tpu.dimension_semantics<parallel>, #tpu.dimension_semantics<arbitrary>], iteration_bounds = array<i64: 2, 1>, scalar_prefetch = 0 : i64, scratch_operands = 0 : i64, tpu.core_type = #tpu.core_type<tc>, window_params = [{transform_indices = @transform_0, window_bounds = array<i64: 1, 4, 256>}, {transform_indices = @transform_1, window_bounds = array<i64: 1, 4, 1>}, {transform_indices = @transform_2, window_bounds = array<i64: 1, 4, 4>}]} {
    %c0_i32 = arith.constant 0 : i32
    %0 = arith.cmpi eq, %arg1, %c0_i32 : i32
    %1 = arith.extui %0 : i1 to i32
    %c0_i32_0 = arith.constant 0 : i32
    %2 = arith.cmpi ne, %1, %c0_i32_0 : i32
    scf.if %2 {
      %cst_16 = arith.constant 0.000000e+00 : f32
      %20 = vector.broadcast %cst_16 : f32 to vector<1x4x1xf32>
      %c0_17 = arith.constant 0 : index
      %c0_18 = arith.constant 0 : index
      %c0_19 = arith.constant 0 : index
      %21 = vector.load %arg3[%c0_17, %c0_18, %c0_19] : memref<1x4x1xf32, #tpu.memory_space<vmem>>, vector<1x4x1xf32>
      tpu.vector_store %arg3[%c0_17, %c0_18, %c0_19], %20 {strides = array<i32>} : memref<1x4x1xf32, #tpu.memory_space<vmem>>, vector<1x4x1xf32>,
      %cst_20 = arith.constant 0.000000e+00 : f32
      %22 = vector.broadcast %cst_20 : f32 to vector<1x4x4xf32>
      %c0_21 = arith.constant 0 : index
      %c0_22 = arith.constant 0 : index
      %c0_23 = arith.constant 0 : index
      %23 = vector.load %arg4[%c0_21, %c0_22, %c0_23] : memref<1x4x4xf32, #tpu.memory_space<vmem>>, vector<1x4x4xf32>
      tpu.vector_store %arg4[%c0_21, %c0_22, %c0_23], %22 {strides = array<i32>} : memref<1x4x4xf32, #tpu.memory_space<vmem>>, vector<1x4x4xf32>,
    } else {
    }
    %c0 = arith.constant 0 : index
    %c0_1 = arith.constant 0 : index
    %c0_2 = arith.constant 0 : index
    %3 = vector.load %arg2[%c0, %c0_1, %c0_2] : memref<1x4x256xf32, #tpu.memory_space<vmem>>, vector<1x4x256xf32>
    %4 = vector.shape_cast %3 : vector<1x4x256xf32> to vector<4x256xf32>
    %c0_3 = arith.constant 0 : index
    %c0_4 = arith.constant 0 : index
    %c0_5 = arith.constant 0 : index
    %5 = vector.load %arg3[%c0_3, %c0_4, %c0_5] : memref<1x4x1xf32, #tpu.memory_space<vmem>>, vector<1x4x1xf32>
    %6 = vector.shape_cast %5 : vector<1x4x1xf32> to vector<4x1xf32>
    %cst = arith.constant dense<0.000000e+00> : vector<4xf32>
    %7 = vector.multi_reduction <add>, %4, %cst [1] : vector<4x256xf32> to vector<4xf32>
    %8 = vector.shape_cast %7 : vector<4xf32> to vector<4x1xf32>
    %9 = arith.addf %6, %8 : vector<4x1xf32>
    %c0_6 = arith.constant 0 : index
    %c0_7 = arith.constant 0 : index
    %c0_8 = arith.constant 0 : index
    %10 = vector.load %arg3[%c0_6, %c0_7, %c0_8] : memref<1x4x1xf32, #tpu.memory_space<vmem>>, vector<1x4x1xf32>
    %11 = vector.shape_cast %10 : vector<1x4x1xf32> to vector<4x1xf32>
    %12 = vector.shape_cast %9 : vector<4x1xf32> to vector<1x4x1xf32>
    tpu.vector_store %arg3[%c0_6, %c0_7, %c0_8], %12 {strides = array<i32>} : memref<1x4x1xf32, #tpu.memory_space<vmem>>, vector<1x4x1xf32>,
    %c0_9 = arith.constant 0 : index
    %c0_10 = arith.constant 0 : index
    %c0_11 = arith.constant 0 : index
    %13 = vector.load %arg4[%c0_9, %c0_10, %c0_11] : memref<1x4x4xf32, #tpu.memory_space<vmem>>, vector<1x4x4xf32>
    %14 = vector.shape_cast %13 : vector<1x4x4xf32> to vector<4x4xf32>
    %cst_12 = arith.constant dense<0.000000e+00> : vector<4x4xf32>
    %15 = tpu.matmul %4, %4, %cst_12 {dimension_numbers = #tpu.dot_dimension_numbers<[1], [1], [0], [0], [0, 0, 1, 0], [], []>} : vector<4x256xf32>, vector<4x256xf32>, vector<4x4xf32> -> vector<4x4xf32>
    %16 = arith.addf %14, %15 : vector<4x4xf32>
    %c0_13 = arith.constant 0 : index
    %c0_14 = arith.constant 0 : index
    %c0_15 = arith.constant 0 : index
    %17 = vector.load %arg4[%c0_13, %c0_14, %c0_15] : memref<1x4x4xf32, #tpu.memory_space<vmem>>, vector<1x4x4xf32>
    %18 = vector.shape_cast %17 : vector<1x4x4xf32> to vector<4x4xf32>
    %19 = vector.shape_cast %16 : vector<4x4xf32> to vector<1x4x4xf32>
    tpu.vector_store %arg4[%c0_13, %c0_14, %c0_15], %19 {strides = array<i32>} : memref<1x4x4xf32, #tpu.memory_space<vmem>>, vector<1x4x4xf32>,
    return
  }
  func.func @transform_0(%arg0: i32, %arg1: i32) -> (i32, i32, i32) {
    %c0_i32 = arith.constant 0 : i32
    %c0_i32_0 = arith.constant 0 : i32
    return %arg0, %c0_i32, %arg1 : i32, i32, i32
  }
  func.func @transform_1(%arg0: i32, %arg1: i32) -> (i32, i32, i32) {
    %c0_i32 = arith.constant 0 : i32
    %c0_i32_0 = arith.constant 0 : i32
    %c0_i32_1 = arith.constant 0 : i32
    return %arg0, %c0_i32, %c0_i32_0 : i32, i32, i32
  }
  func.func @transform_2(%arg0: i32, %arg1: i32) -> (i32, i32, i32) {
    %c0_i32 = arith.constant 0 : i32
    %c0_i32_0 = arith.constant 0 : i32
    %c0_i32_1 = arith.constant 0 : i32
    return %arg0, %c0_i32, %c0_i32_0 : i32, i32, i32
  }
}

module attributes {stable_mosaic.version = 11 : i64} {
  func.func @_apply_kernel(%arg0: i32, %arg1: i32, %arg2: memref<1x4x256xf32, #tpu.memory_space<vmem>>, %arg3: memref<32x4xf32, #tpu.memory_space<vmem>>, %arg4: memref<32x1xf32, #tpu.memory_space<vmem>>, %arg5: memref<8x32xf32, #tpu.memory_space<vmem>>, %arg6: memref<8x1xf32, #tpu.memory_space<vmem>>, %arg7: memref<1x8x256xf32, #tpu.memory_space<vmem>>) attributes {dimension_semantics = [#tpu.dimension_semantics<parallel>, #tpu.dimension_semantics<parallel>], iteration_bounds = array<i64: 2, 1>, scalar_prefetch = 0 : i64, scratch_operands = 0 : i64, tpu.core_type = #tpu.core_type<tc>, window_params = [{transform_indices = @transform_0, window_bounds = array<i64: 1, 4, 256>}, {pipeline_mode = #tpu.pipeline_mode<synchronous>, transform_indices = @transform_1, window_bounds = array<i64: 32, 4>}, {pipeline_mode = #tpu.pipeline_mode<synchronous>, transform_indices = @transform_2, window_bounds = array<i64: 32, 1>}, {pipeline_mode = #tpu.pipeline_mode<synchronous>, transform_indices = @transform_3, window_bounds = array<i64: 8, 32>}, {pipeline_mode = #tpu.pipeline_mode<synchronous>, transform_indices = @transform_4, window_bounds = array<i64: 8, 1>}, {transform_indices = @transform_5, window_bounds = array<i64: 1, 8, 256>}]} {
    %c0 = arith.constant 0 : index
    %c0_0 = arith.constant 0 : index
    %0 = vector.load %arg3[%c0, %c0_0] : memref<32x4xf32, #tpu.memory_space<vmem>>, vector<32x4xf32>
    %c0_1 = arith.constant 0 : index
    %c0_2 = arith.constant 0 : index
    %c0_3 = arith.constant 0 : index
    %1 = vector.load %arg2[%c0_1, %c0_2, %c0_3] : memref<1x4x256xf32, #tpu.memory_space<vmem>>, vector<1x4x256xf32>
    %2 = vector.shape_cast %1 : vector<1x4x256xf32> to vector<4x256xf32>
    %cst = arith.constant dense<0.000000e+00> : vector<32x256xf32>
    %3 = tpu.matmul %0, %2, %cst {dimension_numbers = #tpu.dot_dimension_numbers<[1], [0], [0], [1], [0, 0, 1, 1], [], []>} : vector<32x4xf32>, vector<4x256xf32>, vector<32x256xf32> -> vector<32x256xf32>
    %c0_4 = arith.constant 0 : index
    %c0_5 = arith.constant 0 : index
    %4 = vector.load %arg4[%c0_4, %c0_5] : memref<32x1xf32, #tpu.memory_space<vmem>>, vector<32x1xf32>
    %5 = vector.broadcast %4 : vector<32x1xf32> to vector<32x256xf32>
    %6 = arith.addf %3, %5 : vector<32x256xf32>
    %cst_6 = arith.constant 0.000000e+00 : f32
    %7 = vector.broadcast %cst_6 : f32 to vector<32x256xf32>
    %8 = arith.maximumf %6, %7 : vector<32x256xf32>
    %c0_7 = arith.constant 0 : index
    %c0_8 = arith.constant 0 : index
    %9 = vector.load %arg5[%c0_7, %c0_8] : memref<8x32xf32, #tpu.memory_space<vmem>>, vector<8x32xf32>
    %cst_9 = arith.constant dense<0.000000e+00> : vector<8x256xf32>
    %10 = tpu.matmul %9, %8, %cst_9 {dimension_numbers = #tpu.dot_dimension_numbers<[1], [0], [0], [1], [0, 0, 1, 1], [], []>} : vector<8x32xf32>, vector<32x256xf32>, vector<8x256xf32> -> vector<8x256xf32>
    %c0_10 = arith.constant 0 : index
    %c0_11 = arith.constant 0 : index
    %11 = vector.load %arg6[%c0_10, %c0_11] : memref<8x1xf32, #tpu.memory_space<vmem>>, vector<8x1xf32>
    %12 = vector.broadcast %11 : vector<8x1xf32> to vector<8x256xf32>
    %13 = arith.addf %10, %12 : vector<8x256xf32>
    %c0_12 = arith.constant 0 : index
    %c0_13 = arith.constant 0 : index
    %c0_14 = arith.constant 0 : index
    %14 = vector.load %arg7[%c0_12, %c0_13, %c0_14] : memref<1x8x256xf32, #tpu.memory_space<vmem>>, vector<1x8x256xf32>
    %15 = vector.shape_cast %14 : vector<1x8x256xf32> to vector<8x256xf32>
    %16 = vector.shape_cast %13 : vector<8x256xf32> to vector<1x8x256xf32>
    tpu.vector_store %arg7[%c0_12, %c0_13, %c0_14], %16 {strides = array<i32>} : memref<1x8x256xf32, #tpu.memory_space<vmem>>, vector<1x8x256xf32>,
    return
  }
  func.func @transform_0(%arg0: i32, %arg1: i32) -> (i32, i32, i32) {
    %c0_i32 = arith.constant 0 : i32
    %c0_i32_0 = arith.constant 0 : i32
    return %arg0, %c0_i32, %arg1 : i32, i32, i32
  }
  func.func @transform_1(%arg0: i32, %arg1: i32) -> (i32, i32) {
    %c0_i32 = arith.constant 0 : i32
    %c0_i32_0 = arith.constant 0 : i32
    %c0_i32_1 = arith.constant 0 : i32
    return %c0_i32, %c0_i32_0 : i32, i32
  }
  func.func @transform_2(%arg0: i32, %arg1: i32) -> (i32, i32) {
    %c0_i32 = arith.constant 0 : i32
    %c0_i32_0 = arith.constant 0 : i32
    %c0_i32_1 = arith.constant 0 : i32
    return %c0_i32, %c0_i32_0 : i32, i32
  }
  func.func @transform_3(%arg0: i32, %arg1: i32) -> (i32, i32) {
    %c0_i32 = arith.constant 0 : i32
    %c0_i32_0 = arith.constant 0 : i32
    %c0_i32_1 = arith.constant 0 : i32
    return %c0_i32, %c0_i32_0 : i32, i32
  }
  func.func @transform_4(%arg0: i32, %arg1: i32) -> (i32, i32) {
    %c0_i32 = arith.constant 0 : i32
    %c0_i32_0 = arith.constant 0 : i32
    %c0_i32_1 = arith.constant 0 : i32
    return %c0_i32, %c0_i32_0 : i32, i32
  }
  func.func @transform_5(%arg0: i32, %arg1: i32) -> (i32, i32, i32) {
    %c0_i32 = arith.constant 0 : i32
    %c0_i32_0 = arith.constant 0 : i32
    return %arg0, %c0_i32, %arg1 : i32, i32, i32
  }
}

</mosaic_0001>

<llo_original>
// kernel: mlp2d_forward.2
$region0: #{mlp2d_forward.2}
  #allocation0 [shape = 'u32[]', space=smem, size = 0x4, offset = 0x4, fixed_abs, tag = 'smem constant byte address 0x4 - core index']
  #allocation1 [shape = 'u32[72,128]{1,0:T(1,128)}', space=vmem, size = 0x9000, scoped, tag = 'internal scratch']
  %s0 = inlined_call_operand.vmem [shape: f32[2,4,256], index: 0, kind: input, shape index: {}]
  %s1 = inlined_call_operand.vmem [shape: f32[2,4,1], index: 1, kind: output, shape index: {0}]
  %s2 = inlined_call_operand.vmem [shape: f32[2,4,4], index: 2, kind: output, shape index: {1}]
  %3 = xla_tuple %s1, %s2
  %s4 = sld [smem:[#allocation0]]
  $region49: #{mlp2d_forward.2} parent=0
    _
  %s6 = ssub.s32 1, %s4
  %s7 = scalar_select 0, %s6, %s4
  loop: start=0, step=1, limit=4
  $region2: #{mlp2d_forward.2} parent=0 // loop_pre_header
    _
  $region3: #{mlp2d_forward.2} parent=0 // loop_header
    %s9 = sphi 0, %s13
    %p10 = scmp.ge.s32.totalorder %s9, 4
    %s16 = sphi 0, %s28
    %s17 = sphi 0, %s24
    %s18 = sphi 0, %s16
    %s19 = sphi 0, %s17
    %s20 = sphi 0, %s18
    %s21 = sphi 0, %s19
    %s33 = sphi 0, %s35
    %s36 = sphi 0, %s33
    %s37 = sphi 0, %s36
    %s53 = sphi 0, %s37
    %s59 = sphi 0, %s61
    %s62 = sphi 0, %s59
    %s63 = sphi 0, %s62
    %s79 = sphi 0, %s63
    %s85 = sphi 0, %s87
    %s88 = sphi 0, %s85
    %s89 = sphi 0, %s88
    %s105 = sphi 0, %s89
  $region4: #{mlp2d_forward.2} parent=0 // loop_header_branch
    %12 = sbr.rel (%p10) target = $region8
  $region5: #{mlp2d_forward.2} parent=0 // loop_body
    %s14 = ssub.s32 %s9, 1
    %s15 = ssub.s32 %s9, 2
    %s22 = sadd.s32 1, %s17
    %p23 = scmp.ge.s32.totalorder %s22, 1
    %s24 = scalar_select %p23, 0, %s22
    %s25 = sadd.s32 1, %s16
    %s26 = scalar_select %p23, %s25, %s16
    %p27 = scmp.ge.s32.totalorder %s26, 2
    %s28 = scalar_select %p27, 0, %s26
    %s29 = ssub.s32 %s16, %s28
    %s30 = ssub.s32 %s17, %s24
    %s31 = sor.u32 %s29, %s30
    %p32 = scmp.eq.s32.totalorder %s31, 0
    %s34 = sadd.s32 %s33, 1
    %s35 = scalar_select %p32, %s33, %s34
    %p38 = pneg %p32
    %p39 = scmp.eq.s32.totalorder %s9, 1
    %p40 = por %p38, %p39
    %p41 = scmp.ne.s32.totalorder %s33, %s36
    %p42 = scmp.eq.s32.totalorder %s9, 0
    %p43 = por %p41, %p42
    %p44 = scmp.ne.s32.totalorder %s33, %s36
    %p45 = scmp.eq.s32.totalorder %s14, 1
    %p46 = por %p44, %p45
    %p47 = scmp.ne.s32.totalorder %s36, %s37
    %p48 = scmp.eq.s32.totalorder %s14, 0
    %p49 = por %p47, %p48
    %p50 = scmp.ne.s32.totalorder %s36, %s37
    %p51 = scmp.eq.s32.totalorder %s15, 1
    %p52 = por %p50, %p51
    %p54 = scmp.ne.s32.totalorder %s37, %s53
    %p55 = scmp.eq.s32.totalorder %s15, 0
    %p56 = por %p54, %p55
    %s57 = ssub.s32 %s16, %s28
    %p58 = scmp.eq.s32.totalorder %s57, 0
    %s60 = sadd.s32 %s59, 1
    %s61 = scalar_select %p58, %s59, %s60
    %p64 = pneg %p58
    %p65 = scmp.eq.s32.totalorder %s9, 1
    %p66 = por %p64, %p65
    %p67 = scmp.ne.s32.totalorder %s59, %s62
    %p68 = scmp.eq.s32.totalorder %s9, 0
    %p69 = por %p67, %p68
    %p70 = scmp.ne.s32.totalorder %s59, %s62
    %p71 = scmp.eq.s32.totalorder %s14, 1
    %p72 = por %p70, %p71
    %p73 = scmp.ne.s32.totalorder %s62, %s63
    %p74 = scmp.eq.s32.totalorder %s14, 0
    %p75 = por %p73, %p74
    %p76 = scmp.ne.s32.totalorder %s62, %s63
    %p77 = scmp.eq.s32.totalorder %s15, 1
    %p78 = por %p76, %p77
    %p80 = scmp.ne.s32.totalorder %s63, %s79
    %p81 = scmp.eq.s32.totalorder %s15, 0
    %p82 = por %p80, %p81
    %s83 = ssub.s32 %s16, %s28
    %p84 = scmp.eq.s32.totalorder %s83, 0
    %s86 = sadd.s32 %s85, 1
    %s87 = scalar_select %p84, %s85, %s86
    %p90 = pneg %p84
    %p91 = scmp.eq.s32.totalorder %s9, 1
    %p92 = por %p90, %p91
    %p93 = scmp.ne.s32.totalorder %s85, %s88
    %p94 = scmp.eq.s32.totalorder %s9, 0
    %p95 = por %p93, %p94
    %p96 = scmp.ne.s32.totalorder %s85, %s88
    %p97 = scmp.eq.s32.totalorder %s14, 1
    %p98 = por %p96, %p97
    %p99 = scmp.ne.s32.totalorder %s88, %s89
    %p100 = scmp.eq.s32.totalorder %s14, 0
    %p101 = por %p99, %p100
    %p102 = scmp.ne.s32.totalorder %s88, %s89
    %p103 = scmp.eq.s32.totalorder %s15, 1
    %p104 = por %p102, %p103
    %p106 = scmp.ne.s32.totalorder %s89, %s105
    %p107 = scmp.eq.s32.totalorder %s15, 0
    %p108 = por %p106, %p107
    %p109 = scmp.le.s32.totalorder 1, %s9
    %p110 = scmp.lt.s32.totalorder %s9, 3
    %p111 = pnand %p109, %p110
    %p112 = pneg %p111
    // Predicated region
    $region9: #{mlp2d_forward.2} parent=5 // pred_check
      _
    $region10: #{mlp2d_forward.2} parent=5 // pred_check_branch
      %114 = sbr.rel (%p111) target = $region12
    $region11: #{mlp2d_forward.2} parent=5 // pred_region
      %s115 = ssub.s32 %s9, 1
    $region12: #{mlp2d_forward.2} parent=5 // pred_fallthru
      _
    %p116 = scmp.lt.s32.totalorder %s9, 2
    // Predicated region
    $region13: #{mlp2d_forward.2} parent=5 // pred_check
      %p117 = pneg %p116
    $region14: #{mlp2d_forward.2} parent=5 // pred_check_branch
      %119 = sbr.rel (%p117) target = $region16
    $region15: #{mlp2d_forward.2} parent=5 // pred_region
      // Predicated region
      $region17: #{mlp2d_forward.2} parent=15 // pred_check
        %p120 = pneg %p43
      $region18: #{mlp2d_forward.2} parent=15 // pred_check_branch
        %122 = sbr.rel (%p120) target = $region20
      $region19: #{mlp2d_forward.2} parent=15 // pred_region
        %s123 = smul.u32 2, %s17
        %p124 = scmp.lt.s32.totalorder %s16, 1
        %s125 = scalar_select %p124, %s16, 1
        %p126 = scmp.lt.s32.totalorder %s123, 1
        %s127 = scalar_select %p126, %s123, 1
        %s128 = smul.addr %s125, 2
        %s129 = sadd.s32 %s127, %s128
        %s130 = smul.addr %s129, 4
        %s131 = scalar_lea.vmem %s0, %s130
        %s132 = smul.u32 2, %s17
      $region20: #{mlp2d_forward.2} parent=15 // pred_fallthru
        _
    $region16: #{mlp2d_forward.2} parent=5 // pred_fallthru
      _
    %p133 = scmp.le.s32.totalorder 1, %s9
    %p134 = scmp.lt.s32.totalorder %s9, 3
    %p135 = pnand %p133, %p134
    %p136 = pneg %p135
    // Predicated region
    $region21: #{mlp2d_forward.2} parent=5 // pred_check
      _
    $region22: #{mlp2d_forward.2} parent=5 // pred_check_branch
      %138 = sbr.rel (%p135) target = $region24
    $region23: #{mlp2d_forward.2} parent=5 // pred_region
      %s139 = ssub.s32 %s9, 1
      %s140 = smul.u32 2, %s19
      %p141 = scmp.lt.s32.totalorder %s18, 1
      %s142 = scalar_select %p141, %s18, 1
      %p143 = scmp.lt.s32.totalorder %s140, 1
      %s144 = scalar_select %p143, %s140, 1
      %s145 = smul.addr %s142, 2
      %s146 = sadd.s32 %s144, %s145
      %s147 = smul.addr %s146, 4
      %s148 = scalar_lea.vmem %s0, %s147
      %p149 = pneg %p49
      %p150 = pneg %p46
      %p151 = pneg %p75
      %p152 = pneg %p72
      %p153 = scmp.lt.s32.totalorder %s18, 1
      %s154 = scalar_select %p153, %s18, 1
      %s155 = smul.addr %s154, 4
      %s156 = scalar_lea.vmem %s1, %s155
      %p157 = pneg %p101
      %p158 = pneg %p98
      %p159 = scmp.lt.s32.totalorder %s18, 1
      %s160 = scalar_select %p159, %s18, 1
      %s161 = smul.addr %s160, 4
      %s162 = scalar_lea.vmem %s2, %s161
      %s163 = smul.u32 2, %s19
      %p164 = scmp.lt.s32.totalorder %s18, 1
      %s165 = scalar_select %p164, %s18, 1
      %p166 = scmp.lt.s32.totalorder %s163, 1
      %s167 = scalar_select %p166, %s163, 1
      %s168 = smul.addr %s165, 2
      %s169 = sadd.s32 %s167, %s168
      %s170 = smul.addr %s169, 4
      %s171 = scalar_lea.vmem %s0, %s170
      %s172 = smul.u32 2, %s19
      %p173 = scmp.lt.s32.totalorder %s18, 1
      %s174 = scalar_select %p173, %s18, 1
      %s175 = smul.addr %s174, 4
      %s176 = scalar_lea.vmem %s1, %s175
      %p177 = scmp.lt.s32.totalorder %s18, 1
      %s178 = scalar_select %p177, %s18, 1
      %s179 = smul.addr %s178, 4
      %s180 = scalar_lea.vmem %s2, %s179
      %p181 = scmp.eq.s32.totalorder %s19, 0
      // Predicated region
      $region25: #{mlp2d_forward.2} parent=23 // pred_check
        %p182 = pneg %p181
      $region26: #{mlp2d_forward.2} parent=23 // pred_check_branch
        %184 = sbr.rel (%p182) target = $region28
      $region27: #{mlp2d_forward.2} parent=23 // pred_region
        %vm185 = vcmask 3072
        %186 = vst.msk [vmem:[%s176] sm:$0xf] %vm185, 0.0
        %vm187 = vcmask 27648
        %188 = vst.msk [vmem:[%s180] sm:$0xf] %vm187, 0.0
      $region28: #{mlp2d_forward.2} parent=23 // pred_fallthru
        _
      %v189 = vld [vmem:[%s171] sm:$0xff]
      %v190 = vld [vmem:[%s176] sm:$0xf]
      %192 = vst [vmem:[#allocation1] ss:$2 sm:$0xff] %v189
      %v193 = vld.sshfl [vmem:[#allocation1] sm:$0xff pattern:$0x75316420]
      %v194 = vld.sshfl [vmem:[#allocation1 + $0x8] sm:$0xff pattern:$0x75316420]
      %vm197 = vcmask 1043456
      %v198 = vsel %vm197, %v193, 0.0
      %v199 = vsel %vm197, %v194, 0.0
      %v200 = vadd.f32 %v198, %v199
      %201 = vadd.xlane.f32.xlu0 %v200
      %v202 = vpop.xlane.xlu0 %201
      %v203 = vadd.f32 %v190, %v202
      %vm204 = vcmask 3072
      %205 = vst.msk [vmem:[%s176] sm:$0xf] %vm204, %v203
      %v206 = vld [vmem:[%s180] sm:$0xf]
      %207 = vst [vmem:[#allocation1] ss:$2 sm:$0xff] %v189
      %v208 = vld.sshfl [vmem:[#allocation1] sm:$0xff pattern:$0x75316420]
      %v209 = vld.sshfl [vmem:[#allocation1 + $0x8] sm:$0xff pattern:$0x75316420]
      %212 = vst [vmem:[#allocation1] ss:$2 sm:$0xff] %v189
      %v213 = vld.sshfl [vmem:[#allocation1] sm:$0xff pattern:$0x75316420]
      %v214 = vld.sshfl [vmem:[#allocation1 + $0x8] sm:$0xff pattern:$0x75316420]
      %217 = vmatpush.xpose.msra.mxu0 0.0
      %218 = vmatpush.xpose.msra.mxu0 0.0
      %219 = vmatpush.xpose.msra.mxu0 0.0
      %220 = vmatpush.xpose.msra.mxu0 0.0
      %221 = vmatpush.xpose.msra.mxu0 0.0
      %222 = vmatpush.xpose.msra.mxu0 0.0
      %223 = vmatpush.xpose.msra.mxu0 0.0
      %224 = vmatpush.xpose.msra.mxu0 0.0
      %225 = vmatpush.xpose.msra.mxu0 0.0
      %226 = vmatpush.xpose.msra.mxu0 0.0
      %227 = vmatpush.xpose.msra.mxu0 0.0
      %228 = vmatpush.xpose.msra.mxu0 0.0
      %229 = vmatpush.xpose.msra.mxu0 0.0
      %230 = vmatpush.xpose.msra.mxu0 0.0
      %231 = vmatpush.xpose.msra.mxu0 0.0
      %232 = vmatpush.xpose.msra.mxu0 %v213
      %233 = vmatmul.f32.gmra.mxu0 %v208
      %v234 = vpop.f32.mrf.mxu0
      %v235 = vadd.f32 0.0, %v234
      %236 = vdwg.mxu0
      %237 = vmatpush.xpose.msra.mxu0 0.0
      %238 = vmatpush.xpose.msra.mxu0 0.0
      %239 = vmatpush.xpose.msra.mxu0 0.0
      %240 = vmatpush.xpose.msra.mxu0 0.0
      %241 = vmatpush.xpose.msra.mxu0 0.0
      %242 = vmatpush.xpose.msra.mxu0 0.0
      %243 = vmatpush.xpose.msra.mxu0 0.0
      %244 = vmatpush.xpose.msra.mxu0 0.0
      %245 = vmatpush.xpose.msra.mxu0 0.0
      %246 = vmatpush.xpose.msra.mxu0 0.0
      %247 = vmatpush.xpose.msra.mxu0 0.0
      %248 = vmatpush.xpose.msra.mxu0 0.0
      %249 = vmatpush.xpose.msra.mxu0 0.0
      %250 = vmatpush.xpose.msra.mxu0 0.0
      %251 = vmatpush.xpose.msra.mxu0 0.0
      %252 = vmatpush.xpose.msra.mxu0 %v214
      %253 = vmatmul.f32.gmra.mxu0 %v209
      %v254 = vpop.f32.mrf.mxu0
      %v255 = vadd.f32 %v235, %v254
      %256 = vdwg.mxu0
      %v257 = vadd.f32 %v206, %v255
      %vm258 = vcmask 27648
      %259 = vst.msk [vmem:[%s180] sm:$0xf] %vm258, %v257
      %p260 = scmp.lt.s32.totalorder %s18, 1
      %s261 = scalar_select %p260, %s18, 1
      %s262 = smul.addr %s261, 4
      %s263 = scalar_lea.vmem %s1, %s262
      %p264 = scmp.lt.s32.totalorder %s18, 1
      %s265 = scalar_select %p264, %s18, 1
      %s266 = smul.addr %s265, 4
      %s267 = scalar_lea.vmem %s2, %s266
      // Predicated region
      $region29: #{mlp2d_forward.2} parent=23 // pred_check
        %p268 = pneg %p72
      $region30: #{mlp2d_forward.2} parent=23 // pred_check_branch
        %270 = sbr.rel (%p268) target = $region32
      $region31: #{mlp2d_forward.2} parent=23 // pred_region
        _
      $region32: #{mlp2d_forward.2} parent=23 // pred_fallthru
        _
      // Predicated region
      $region33: #{mlp2d_forward.2} parent=23 // pred_check
        %p271 = pneg %p98
      $region34: #{mlp2d_forward.2} parent=23 // pred_check_branch
        %273 = sbr.rel (%p271) target = $region36
      $region35: #{mlp2d_forward.2} parent=23 // pred_region
        _
      $region36: #{mlp2d_forward.2} parent=23 // pred_fallthru
        _
    $region24: #{mlp2d_forward.2} parent=5 // pred_fallthru
      _
    %p274 = scmp.le.s32.totalorder 2, %s9
    // Predicated region
    $region37: #{mlp2d_forward.2} parent=5 // pred_check
      %p275 = pneg %p274
    $region38: #{mlp2d_forward.2} parent=5 // pred_check_branch
      %277 = sbr.rel (%p275) target = $region40
    $region39: #{mlp2d_forward.2} parent=5 // pred_region
      %s278 = ssub.s32 %s9, 2
      // Predicated region
      $region41: #{mlp2d_forward.2} parent=39 // pred_check
        %p279 = pneg %p78
      $region42: #{mlp2d_forward.2} parent=39 // pred_check_branch
        %281 = sbr.rel (%p279) target = $region44
      $region43: #{mlp2d_forward.2} parent=39 // pred_region
        %p282 = scmp.lt.s32.totalorder %s20, 1
        %s283 = scalar_select %p282, %s20, 1
        %s284 = smul.addr %s283, 4
        %s285 = scalar_lea.vmem %s1, %s284
      $region44: #{mlp2d_forward.2} parent=39 // pred_fallthru
        _
      // Predicated region
      $region45: #{mlp2d_forward.2} parent=39 // pred_check
        %p286 = pneg %p104
      $region46: #{mlp2d_forward.2} parent=39 // pred_check_branch
        %288 = sbr.rel (%p286) target = $region48
      $region47: #{mlp2d_forward.2} parent=39 // pred_region
        %p289 = scmp.lt.s32.totalorder %s20, 1
        %s290 = scalar_select %p289, %s20, 1
        %s291 = smul.addr %s290, 4
        %s292 = scalar_lea.vmem %s2, %s291
      $region48: #{mlp2d_forward.2} parent=39 // pred_fallthru
        _
    $region40: #{mlp2d_forward.2} parent=5 // pred_fallthru
      _
  $region6: #{mlp2d_forward.2} parent=0 // loop_footer
    %s13 = sadd.s32 1, %s9
  $region7: #{mlp2d_forward.2} parent=0 // loop_footer_branch
    %8 = sbr.rel target = $region3
  $region8: #{mlp2d_forward.2} parent=0 // loop_exit
    _

// kernel: mlp2d_forward.3
$region0: #{mlp2d_forward.3}
  #allocation0 [shape = 'u32[]', space=smem, size = 0x4, offset = 0x4, fixed_abs, tag = 'smem constant byte address 0x4 - core index']
  #allocation1 [shape = 'u32[72,128]{1,0:T(1,128)}', space=vmem, size = 0x9000, scoped, tag = 'internal scratch']
  %s0 = inlined_call_operand.vmem [shape: f32[2,4,256], index: 0, kind: input, shape index: {}]
  %s1 = inlined_call_operand.vmem [shape: f32[32,4], index: 1, kind: input, shape index: {}]
  %s2 = inlined_call_operand.vmem [shape: f32[32,1], index: 2, kind: input, shape index: {}]
  %s3 = inlined_call_operand.vmem [shape: f32[8,32], index: 3, kind: input, shape index: {}]
  %s4 = inlined_call_operand.vmem [shape: f32[8,1], index: 4, kind: input, shape index: {}]
  %s5 = inlined_call_operand.vmem [shape: f32[2,8,256], index: 5, kind: output, shape index: {}]
  %s6 = sld [smem:[#allocation0]]
  $region53: #{mlp2d_forward.3} parent=0
    _
  %s8 = ssub.s32 1, %s6
  %s9 = scalar_select 0, %s8, %s6
  loop: start=0, step=1, limit=4
  $region2: #{mlp2d_forward.3} parent=0 // loop_pre_header
    _
  $region3: #{mlp2d_forward.3} parent=0 // loop_header
    %s11 = sphi 0, %s15
    %p12 = scmp.ge.s32.totalorder %s11, 4
    %s18 = sphi 0, %s30
    %s19 = sphi 0, %s26
    %s20 = sphi 0, %s18
    %s21 = sphi 0, %s19
    %s22 = sphi 0, %s20
    %s23 = sphi 0, %s21
    %s35 = sphi 0, %s37
    %s38 = sphi 0, %s35
    %s39 = sphi 0, %s38
    %s55 = sphi 0, %s39
    %s59 = sphi 0, %s59
    %s61 = sphi 0, %s59
    %s62 = sphi 0, %s61
    %s76 = sphi 0, %s62
    %s80 = sphi 0, %s80
    %s82 = sphi 0, %s80
    %s83 = sphi 0, %s82
    %s97 = sphi 0, %s83
    %s101 = sphi 0, %s101
    %s103 = sphi 0, %s101
    %s104 = sphi 0, %s103
    %s118 = sphi 0, %s104
    %s122 = sphi 0, %s122
    %s124 = sphi 0, %s122
    %s125 = sphi 0, %s124
    %s139 = sphi 0, %s125
    %s147 = sphi 0, %s149
    %s150 = sphi 0, %s147
    %s151 = sphi 0, %s150
    %s167 = sphi 0, %s151
  $region4: #{mlp2d_forward.3} parent=0 // loop_header_branch
    %14 = sbr.rel (%p12) target = $region8
  $region5: #{mlp2d_forward.3} parent=0 // loop_body
    %s16 = ssub.s32 %s11, 1
    %s17 = ssub.s32 %s11, 2
    %s24 = sadd.s32 1, %s19
    %p25 = scmp.ge.s32.totalorder %s24, 1
    %s26 = scalar_select %p25, 0, %s24
    %s27 = sadd.s32 1, %s18
    %s28 = scalar_select %p25, %s27, %s18
    %p29 = scmp.ge.s32.totalorder %s28, 2
    %s30 = scalar_select %p29, 0, %s28
    %s31 = ssub.s32 %s18, %s30
    %s32 = ssub.s32 %s19, %s26
    %s33 = sor.u32 %s31, %s32
    %p34 = scmp.eq.s32.totalorder %s33, 0
    %s36 = sadd.s32 %s35, 1
    %s37 = scalar_select %p34, %s35, %s36
    %p40 = pneg %p34
    %p41 = scmp.eq.s32.totalorder %s11, 1
    %p42 = por %p40, %p41
    %p43 = scmp.ne.s32.totalorder %s35, %s38
    %p44 = scmp.eq.s32.totalorder %s11, 0
    %p45 = por %p43, %p44
    %p46 = scmp.ne.s32.totalorder %s35, %s38
    %p47 = scmp.eq.s32.totalorder %s16, 1
    %p48 = por %p46, %p47
    %p49 = scmp.ne.s32.totalorder %s38, %s39
    %p50 = scmp.eq.s32.totalorder %s16, 0
    %p51 = por %p49, %p50
    %p52 = scmp.ne.s32.totalorder %s38, %s39
    %p53 = scmp.eq.s32.totalorder %s17, 1
    %p54 = por %p52, %p53
    %p56 = scmp.ne.s32.totalorder %s39, %s55
    %p57 = scmp.eq.s32.totalorder %s17, 0
    %p58 = por %p56, %p57
    %s60 = sadd.s32 %s59, 1
    %p63 = scmp.eq.s32.totalorder %s11, 1
    %p64 = scmp.ne.s32.totalorder %s59, %s61
    %p65 = scmp.eq.s32.totalorder %s11, 0
    %p66 = por %p64, %p65
    %p67 = scmp.ne.s32.totalorder %s59, %s61
    %p68 = scmp.eq.s32.totalorder %s16, 1
    %p69 = por %p67, %p68
    %p70 = scmp.ne.s32.totalorder %s61, %s62
    %p71 = scmp.eq.s32.totalorder %s16, 0
    %p72 = por %p70, %p71
    %p73 = scmp.ne.s32.totalorder %s61, %s62
    %p74 = scmp.eq.s32.totalorder %s17, 1
    %p75 = por %p73, %p74
    %p77 = scmp.ne.s32.totalorder %s62, %s76
    %p78 = scmp.eq.s32.totalorder %s17, 0
    %p79 = por %p77, %p78
    %s81 = sadd.s32 %s80, 1
    %p84 = scmp.eq.s32.totalorder %s11, 1
    %p85 = scmp.ne.s32.totalorder %s80, %s82
    %p86 = scmp.eq.s32.totalorder %s11, 0
    %p87 = por %p85, %p86
    %p88 = scmp.ne.s32.totalorder %s80, %s82
    %p89 = scmp.eq.s32.totalorder %s16, 1
    %p90 = por %p88, %p89
    %p91 = scmp.ne.s32.totalorder %s82, %s83
    %p92 = scmp.eq.s32.totalorder %s16, 0
    %p93 = por %p91, %p92
    %p94 = scmp.ne.s32.totalorder %s82, %s83
    %p95 = scmp.eq.s32.totalorder %s17, 1
    %p96 = por %p94, %p95
    %p98 = scmp.ne.s32.totalorder %s83, %s97
    %p99 = scmp.eq.s32.totalorder %s17, 0
    %p100 = por %p98, %p99
    %s102 = sadd.s32 %s101, 1
    %p105 = scmp.eq.s32.totalorder %s11, 1
    %p106 = scmp.ne.s32.totalorder %s101, %s103
    %p107 = scmp.eq.s32.totalorder %s11, 0
    %p108 = por %p106, %p107
    %p109 = scmp.ne.s32.totalorder %s101, %s103
    %p110 = scmp.eq.s32.totalorder %s16, 1
    %p111 = por %p109, %p110
    %p112 = scmp.ne.s32.totalorder %s103, %s104
    %p113 = scmp.eq.s32.totalorder %s16, 0
    %p114 = por %p112, %p113
    %p115 = scmp.ne.s32.totalorder %s103, %s104
    %p116 = scmp.eq.s32.totalorder %s17, 1
    %p117 = por %p115, %p116
    %p119 = scmp.ne.s32.totalorder %s104, %s118
    %p120 = scmp.eq.s32.totalorder %s17, 0
    %p121 = por %p119, %p120
    %s123 = sadd.s32 %s122, 1
    %p126 = scmp.eq.s32.totalorder %s11, 1
    %p127 = scmp.ne.s32.totalorder %s122, %s124
    %p128 = scmp.eq.s32.totalorder %s11, 0
    %p129 = por %p127, %p128
    %p130 = scmp.ne.s32.totalorder %s122, %s124
    %p131 = scmp.eq.s32.totalorder %s16, 1
    %p132 = por %p130, %p131
    %p133 = scmp.ne.s32.totalorder %s124, %s125
    %p134 = scmp.eq.s32.totalorder %s16, 0
    %p135 = por %p133, %p134
    %p136 = scmp.ne.s32.totalorder %s124, %s125
    %p137 = scmp.eq.s32.totalorder %s17, 1
    %p138 = por %p136, %p137
    %p140 = scmp.ne.s32.totalorder %s125, %s139
    %p141 = scmp.eq.s32.totalorder %s17, 0
    %p142 = por %p140, %p141
    %s143 = ssub.s32 %s18, %s30
    %s144 = ssub.s32 %s19, %s26
    %s145 = sor.u32 %s143, %s144
    %p146 = scmp.eq.s32.totalorder %s145, 0
    %s148 = sadd.s32 %s147, 1
    %s149 = scalar_select %p146, %s147, %s148
    %p152 = pneg %p146
    %p153 = scmp.eq.s32.totalorder %s11, 1
    %p154 = por %p152, %p153
    %p155 = scmp.ne.s32.totalorder %s147, %s150
    %p156 = scmp.eq.s32.totalorder %s11, 0
    %p157 = por %p155, %p156
    %p158 = scmp.ne.s32.totalorder %s147, %s150
    %p159 = scmp.eq.s32.totalorder %s16, 1
    %p160 = por %p158, %p159
    %p161 = scmp.ne.s32.totalorder %s150, %s151
    %p162 = scmp.eq.s32.totalorder %s16, 0
    %p163 = por %p161, %p162
    %p164 = scmp.ne.s32.totalorder %s150, %s151
    %p165 = scmp.eq.s32.totalorder %s17, 1
    %p166 = por %p164, %p165
    %p168 = scmp.ne.s32.totalorder %s151, %s167
    %p169 = scmp.eq.s32.totalorder %s17, 0
    %p170 = por %p168, %p169
    %p171 = scmp.le.s32.totalorder 1, %s11
    %p172 = scmp.lt.s32.totalorder %s11, 3
    %p173 = pnand %p171, %p172
    %p174 = pneg %p173
    // Predicated region
    $region9: #{mlp2d_forward.3} parent=5 // pred_check
      _
    $region10: #{mlp2d_forward.3} parent=5 // pred_check_branch
      %176 = sbr.rel (%p173) target = $region12
    $region11: #{mlp2d_forward.3} parent=5 // pred_region
      %s177 = ssub.s32 %s11, 1
      // Predicated region
      $region13: #{mlp2d_forward.3} parent=11 // pred_check
        %p178 = pneg %p72
      $region14: #{mlp2d_forward.3} parent=11 // pred_check_branch
        %180 = sbr.rel (%p178) target = $region16
      $region15: #{mlp2d_forward.3} parent=11 // pred_region
        _
      $region16: #{mlp2d_forward.3} parent=11 // pred_fallthru
        _
      // Predicated region
      $region17: #{mlp2d_forward.3} parent=11 // pred_check
        %p181 = pneg %p93
      $region18: #{mlp2d_forward.3} parent=11 // pred_check_branch
        %183 = sbr.rel (%p181) target = $region20
      $region19: #{mlp2d_forward.3} parent=11 // pred_region
        _
      $region20: #{mlp2d_forward.3} parent=11 // pred_fallthru
        _
      // Predicated region
      $region21: #{mlp2d_forward.3} parent=11 // pred_check
        %p184 = pneg %p114
      $region22: #{mlp2d_forward.3} parent=11 // pred_check_branch
        %186 = sbr.rel (%p184) target = $region24
      $region23: #{mlp2d_forward.3} parent=11 // pred_region
        _
      $region24: #{mlp2d_forward.3} parent=11 // pred_fallthru
        _
      // Predicated region
      $region25: #{mlp2d_forward.3} parent=11 // pred_check
        %p187 = pneg %p135
      $region26: #{mlp2d_forward.3} parent=11 // pred_check_branch
        %189 = sbr.rel (%p187) target = $region28
      $region27: #{mlp2d_forward.3} parent=11 // pred_region
        _
      $region28: #{mlp2d_forward.3} parent=11 // pred_fallthru
        _
    $region12: #{mlp2d_forward.3} parent=5 // pred_fallthru
      _
    %p190 = scmp.lt.s32.totalorder %s11, 2
    // Predicated region
    $region29: #{mlp2d_forward.3} parent=5 // pred_check
      %p191 = pneg %p190
    $region30: #{mlp2d_forward.3} parent=5 // pred_check_branch
      %193 = sbr.rel (%p191) target = $region32
    $region31: #{mlp2d_forward.3} parent=5 // pred_region
      // Predicated region
      $region33: #{mlp2d_forward.3} parent=31 // pred_check
        %p194 = pneg %p45
      $region34: #{mlp2d_forward.3} parent=31 // pred_check_branch
        %196 = sbr.rel (%p194) target = $region36
      $region35: #{mlp2d_forward.3} parent=31 // pred_region
        %s197 = smul.u32 2, %s19
        %p198 = scmp.lt.s32.totalorder %s18, 1
        %s199 = scalar_select %p198, %s18, 1
        %p200 = scmp.lt.s32.totalorder %s197, 1
        %s201 = scalar_select %p200, %s197, 1
        %s202 = smul.addr %s199, 2
        %s203 = sadd.s32 %s201, %s202
        %s204 = smul.addr %s203, 4
        %s205 = scalar_lea.vmem %s0, %s204
        %s206 = smul.u32 2, %s19
      $region36: #{mlp2d_forward.3} parent=31 // pred_fallthru
        _
    $region32: #{mlp2d_forward.3} parent=5 // pred_fallthru
      _
    %p207 = scmp.le.s32.totalorder 1, %s11
    %p208 = scmp.lt.s32.totalorder %s11, 3
    %p209 = pnand %p207, %p208
    %p210 = pneg %p209
    // Predicated region
    $region37: #{mlp2d_forward.3} parent=5 // pred_check
      _
    $region38: #{mlp2d_forward.3} parent=5 // pred_check_branch
      %212 = sbr.rel (%p209) target = $region40
    $region39: #{mlp2d_forward.3} parent=5 // pred_region
      %s213 = ssub.s32 %s11, 1
      %s214 = smul.u32 2, %s21
      %p215 = scmp.lt.s32.totalorder %s20, 1
      %s216 = scalar_select %p215, %s20, 1
      %p217 = scmp.lt.s32.totalorder %s214, 1
      %s218 = scalar_select %p217, %s214, 1
      %s219 = smul.addr %s216, 2
      %s220 = sadd.s32 %s218, %s219
      %s221 = smul.addr %s220, 4
      %s222 = scalar_lea.vmem %s0, %s221
      %p223 = pneg %p51
      %p224 = pneg %p48
      %p225 = pneg %p72
      %p226 = pneg %p69
      %p227 = pneg %p93
      %p228 = pneg %p90
      %p229 = pneg %p114
      %p230 = pneg %p111
      %p231 = pneg %p135
      %p232 = pneg %p132
      %p233 = pneg %p163
      %p234 = pneg %p160
      %s235 = smul.u32 2, %s21
      %p236 = scmp.lt.s32.totalorder %s20, 1
      %s237 = scalar_select %p236, %s20, 1
      %p238 = scmp.lt.s32.totalorder %s235, 1
      %s239 = scalar_select %p238, %s235, 1
      %s240 = smul.addr %s237, 2
      %s241 = sadd.s32 %s239, %s240
      %s242 = smul.addr %s241, 8
      %s243 = scalar_lea.vmem %s5, %s242
      %s244 = smul.u32 2, %s21
      %p245 = scmp.lt.s32.totalorder %s20, 1
      %s246 = scalar_select %p245, %s20, 1
      %p247 = scmp.lt.s32.totalorder %s244, 1
      %s248 = scalar_select %p247, %s244, 1
      %s249 = smul.addr %s246, 2
      %s250 = sadd.s32 %s248, %s249
      %s251 = smul.addr %s250, 4
      %s252 = scalar_lea.vmem %s0, %s251
      %s253 = smul.u32 2, %s21
      %s254 = smul.u32 2, %s21
      %p255 = scmp.lt.s32.totalorder %s20, 1
      %s256 = scalar_select %p255, %s20, 1
      %p257 = scmp.lt.s32.totalorder %s254, 1
      %s258 = scalar_select %p257, %s254, 1
      %s259 = smul.addr %s256, 2
      %s260 = sadd.s32 %s258, %s259
      %s261 = smul.addr %s260, 8
      %s262 = scalar_lea.vmem %s5, %s261
      %s263 = smul.u32 2, %s21
      %v264 = vld [vmem:[%s1] sm:$0xff]
      %v265 = vld [vmem:[%s1 + $0x8] sm:$0xff]
      %v266 = vld [vmem:[%s1 + $0x10] sm:$0xff]
      %v267 = vld [vmem:[%s1 + $0x18] sm:$0xff]
      %v268 = vld [vmem:[%s252] sm:$0xff]
      %v269 = vld [vmem:[%s2] sm:$0xff]
      %v270 = vld [vmem:[%s2 + $0x8] sm:$0xff]
      %v271 = vld [vmem:[%s2 + $0x10] sm:$0xff]
      %v272 = vld [vmem:[%s2 + $0x18] sm:$0xff]
      %274 = vset.pattern.permute.xlu0 0
      %275 = vperm.xlu0 %274, %v269
      %v276 = vpop.permute.xlu0 %275
      %279 = vset.pattern.permute.xlu0 0
      %280 = vperm.xlu0 %279, %v270
      %v281 = vpop.permute.xlu0 %280
      %284 = vset.pattern.permute.xlu0 0
      %285 = vperm.xlu0 %284, %v271
      %v286 = vpop.permute.xlu0 %285
      %289 = vset.pattern.permute.xlu0 0
      %290 = vperm.xlu0 %289, %v272
      %v291 = vpop.permute.xlu0 %290
      %294 = vst [vmem:[#allocation1] ss:$2 sm:$0xff] %v268
      %v295 = vld.sshfl [vmem:[#allocation1] sm:$0xff pattern:$0x75316420]
      %v296 = vld.sshfl [vmem:[#allocation1 + $0x8] sm:$0xff pattern:$0x75316420]
      %vm297 = vcmask 31744
      %v299 = vsel %vm297, %v264, 0
      %v302 = vsel %vm297, %v265, 0
      %v305 = vsel %vm297, %v266, 0
      %v308 = vsel %vm297, %v267, 0
      %vm310 = vcmask 1043456
      %v311 = vsel %vm310, %v295, 0
      %v313 = vsel %vm310, %v296, 0
      %315 = vmatpush.msra.mxu0 0.0
      %316 = vmatpush.msra.mxu0 0.0
      %317 = vmatpush.msra.mxu0 0.0
      %318 = vmatpush.msra.mxu0 0.0
      %319 = vmatpush.msra.mxu0 0.0
      %320 = vmatpush.msra.mxu0 0.0
      %321 = vmatpush.msra.mxu0 0.0
      %322 = vmatpush.msra.mxu0 0.0
      %323 = vmatpush.msra.mxu0 0.0
      %324 = vmatpush.msra.mxu0 0.0
      %325 = vmatpush.msra.mxu0 0.0
      %326 = vmatpush.msra.mxu0 0.0
      %327 = vmatpush.msra.mxu0 0.0
      %328 = vmatpush.msra.mxu0 0.0
      %329 = vmatpush.msra.mxu0 0.0
      %330 = vmatpush.msra.mxu0 %v311
      %331 = vmatmul.f32.gmra.mxu0 %v299
      %v332 = vpop.f32.mrf.mxu0
      %v333 = vadd.f32 %v276, %v332
      %334 = vmatmul.f32.gmra.mxu0 %v302
      %v335 = vpop.f32.mrf.mxu0
      %v336 = vadd.f32 %v281, %v335
      %337 = vmatmul.f32.gmra.mxu0 %v305
      %v338 = vpop.f32.mrf.mxu0
      %v339 = vadd.f32 %v286, %v338
      %340 = vmatmul.f32.gmra.mxu0 %v308
      %v341 = vpop.f32.mrf.mxu0
      %v342 = vadd.f32 %v291, %v341
      %343 = vdwg.mxu0
      %344 = vmatpush.msra.mxu0 0.0
      %345 = vmatpush.msra.mxu0 0.0
      %346 = vmatpush.msra.mxu0 0.0
      %347 = vmatpush.msra.mxu0 0.0
      %348 = vmatpush.msra.mxu0 0.0
      %349 = vmatpush.msra.mxu0 0.0
      %350 = vmatpush.msra.mxu0 0.0
      %351 = vmatpush.msra.mxu0 0.0
      %352 = vmatpush.msra.mxu0 0.0
      %353 = vmatpush.msra.mxu0 0.0
      %354 = vmatpush.msra.mxu0 0.0
      %355 = vmatpush.msra.mxu0 0.0
      %356 = vmatpush.msra.mxu0 0.0
      %357 = vmatpush.msra.mxu0 0.0
      %358 = vmatpush.msra.mxu0 0.0
      %359 = vmatpush.msra.mxu0 %v313
      %360 = vmatmul.f32.gmra.mxu0 %v299
      %v361 = vpop.f32.mrf.mxu0
      %v362 = vadd.f32 %v276, %v361
      %363 = vmatmul.f32.gmra.mxu0 %v302
      %v364 = vpop.f32.mrf.mxu0
      %v365 = vadd.f32 %v281, %v364
      %366 = vmatmul.f32.gmra.mxu0 %v305
      %v367 = vpop.f32.mrf.mxu0
      %v368 = vadd.f32 %v286, %v367
      %369 = vmatmul.f32.gmra.mxu0 %v308
      %v370 = vpop.f32.mrf.mxu0
      %v371 = vadd.f32 %v291, %v370
      %372 = vdwg.mxu0
      %v373 = vmax.f32 %v333, 0.0
      %v374 = vmax.f32 %v362, 0.0
      %v375 = vmax.f32 %v336, 0.0
      %v376 = vmax.f32 %v365, 0.0
      %v377 = vmax.f32 %v339, 0.0
      %v378 = vmax.f32 %v368, 0.0
      %v379 = vmax.f32 %v342, 0.0
      %v380 = vmax.f32 %v371, 0.0
      %v381 = vld [vmem:[%s3] sm:$0xff]
      %v382 = vld [vmem:[%s4] sm:$0xff]
      %384 = vset.pattern.permute.xlu0 0
      %385 = vperm.xlu0 %384, %v382
      %v386 = vpop.permute.xlu0 %385
      %vm388 = vcmask 261120
      %v390 = vsel %vm388, %v381, 0
      %392 = vmatpush.msra.mxu0 0.0
      %393 = vmatpush.msra.mxu0 0.0
      %394 = vmatpush.msra.mxu0 0.0
      %395 = vmatpush.msra.mxu0 0.0
      %396 = vmatpush.msra.mxu0 0.0
      %397 = vmatpush.msra.mxu0 0.0
      %398 = vmatpush.msra.mxu0 0.0
      %399 = vmatpush.msra.mxu0 0.0
      %400 = vmatpush.msra.mxu0 0.0
      %401 = vmatpush.msra.mxu0 0.0
      %402 = vmatpush.msra.mxu0 0.0
      %403 = vmatpush.msra.mxu0 0.0
      %404 = vmatpush.msra.mxu0 %v379
      %405 = vmatpush.msra.mxu0 %v377
      %406 = vmatpush.msra.mxu0 %v375
      %407 = vmatpush.msra.mxu0 %v373
      %408 = vmatmul.f32.gmra.mxu0 %v390
      %v409 = vpop.f32.mrf.mxu0
      %v410 = vadd.f32 %v386, %v409
      %411 = vdwg.mxu0
      %412 = vmatpush.msra.mxu0 0.0
      %413 = vmatpush.msra.mxu0 0.0
      %414 = vmatpush.msra.mxu0 0.0
      %415 = vmatpush.msra.mxu0 0.0
      %416 = vmatpush.msra.mxu0 0.0
      %417 = vmatpush.msra.mxu0 0.0
      %418 = vmatpush.msra.mxu0 0.0
      %419 = vmatpush.msra.mxu0 0.0
      %420 = vmatpush.msra.mxu0 0.0
      %421 = vmatpush.msra.mxu0 0.0
      %422 = vmatpush.msra.mxu0 0.0
      %423 = vmatpush.msra.mxu0 0.0
      %424 = vmatpush.msra.mxu0 %v380
      %425 = vmatpush.msra.mxu0 %v378
      %426 = vmatpush.msra.mxu0 %v376
      %427 = vmatpush.msra.mxu0 %v374
      %428 = vmatmul.f32.gmra.mxu0 %v390
      %v429 = vpop.f32.mrf.mxu0
      %v430 = vadd.f32 %v386, %v429
      %431 = vdwg.mxu0
      %432 = vst [vmem:[%s262] sm:$0xff] %v410
      %433 = vst [vmem:[%s262 + $0x8] sm:$0xff] %v430
      %s434 = smul.u32 2, %s21
      %p435 = scmp.lt.s32.totalorder %s20, 1
      %s436 = scalar_select %p435, %s20, 1
      %p437 = scmp.lt.s32.totalorder %s434, 1
      %s438 = scalar_select %p437, %s434, 1
      %s439 = smul.addr %s436, 2
      %s440 = sadd.s32 %s438, %s439
      %s441 = smul.addr %s440, 8
      %s442 = scalar_lea.vmem %s5, %s441
      // Predicated region
      $region41: #{mlp2d_forward.3} parent=39 // pred_check
        %p443 = pneg %p160
      $region42: #{mlp2d_forward.3} parent=39 // pred_check_branch
        %445 = sbr.rel (%p443) target = $region44
      $region43: #{mlp2d_forward.3} parent=39 // pred_region
        %s446 = smul.u32 2, %s21
      $region44: #{mlp2d_forward.3} parent=39 // pred_fallthru
        _
    $region40: #{mlp2d_forward.3} parent=5 // pred_fallthru
      _
    %p447 = scmp.le.s32.totalorder 2, %s11
    // Predicated region
    $region45: #{mlp2d_forward.3} parent=5 // pred_check
      %p448 = pneg %p447
    $region46: #{mlp2d_forward.3} parent=5 // pred_check_branch
      %450 = sbr.rel (%p448) target = $region48
    $region47: #{mlp2d_forward.3} parent=5 // pred_region
      %s451 = ssub.s32 %s11, 2
      // Predicated region
      $region49: #{mlp2d_forward.3} parent=47 // pred_check
        %p452 = pneg %p166
      $region50: #{mlp2d_forward.3} parent=47 // pred_check_branch
        %454 = sbr.rel (%p452) target = $region52
      $region51: #{mlp2d_forward.3} parent=47 // pred_region
        %s455 = smul.u32 2, %s23
        %p456 = scmp.lt.s32.totalorder %s22, 1
        %s457 = scalar_select %p456, %s22, 1
        %p458 = scmp.lt.s32.totalorder %s455, 1
        %s459 = scalar_select %p458, %s455, 1
        %s460 = smul.addr %s457, 2
        %s461 = sadd.s32 %s459, %s460
        %s462 = smul.addr %s461, 8
        %s463 = scalar_lea.vmem %s5, %s462
      $region52: #{mlp2d_forward.3} parent=47 // pred_fallthru
        _
    $region48: #{mlp2d_forward.3} parent=5 // pred_fallthru
      _
  $region6: #{mlp2d_forward.3} parent=0 // loop_footer
    %s15 = sadd.s32 1, %s11
  $region7: #{mlp2d_forward.3} parent=0 // loop_footer_branch
    %10 = sbr.rel target = $region3
  $region8: #{mlp2d_forward.3} parent=0 // loop_exit
    _

</llo_original>
